<compile_context>
chip_gen: v6e
topology: v6e:2x2x1
jax: 0.10.0
libtpu: 0.0.40
codegen_flags: <defaults>
</compile_context>

<pallas_src>
import jax
import jax.numpy as jnp
from jax.experimental import pallas as pl
from jax.experimental.pallas import tpu as pltpu

LANE = 128  # lane width; each gate's columns are padded to a multiple of this


def _round_up(x, m):
    return (x + m - 1) // m * m


def _resident_spec(shape):
    """BlockSpec for an operand that stays VMEM-resident across the whole grid."""
    index_map = lambda i: tuple(0 for _ in shape)
    try:
        return pl.BlockSpec(shape, index_map, pipeline_mode=pl.Buffered(1))
    except TypeError:  # older jax without pipeline_mode kwarg
        return pl.BlockSpec(shape, index_map)


# ----------------------------------------------------------------------------- kernel
def gru_cell_kernel(x_ref, h_ref, wx_ref, bx_ref, wh_ref, bhn_ref, out_ref):
    hp = out_ref.shape[-1]            # padded hidden size (multiple of 128)

    h_f32 = h_ref[...]                # f32, needed for the final blend

    # Two fused, lane-dense MXU matmuls (bf16 operands, f32 accumulation).
    # x is already bf16 (streamed bf16 from HBM); h is cast once for the MXU.
    gx = jnp.dot(x_ref[...], wx_ref[...], preferred_element_type=jnp.float32) + bx_ref[...]
    gh = jnp.dot(h_f32.astype(jnp.bfloat16), wh_ref[...],
                 preferred_element_type=jnp.float32)

    # r and i gates: single (TILE_B, 2*Hp) add + sigmoid on full vregs.
    # (b_hr / b_hi were folded into bx at prep time.)
    ri = jax.nn.sigmoid(gx[:, : 2 * hp] + gh[:, : 2 * hp])
    resetgate = ri[:, :hp]
    inputgate = ri[:, hp:]

    # n gate: b_hn is added to h_n BEFORE the reset multiply (torch semantics).
    h_n = gh[:, 2 * hp:] + bhn_ref[...]
    newgate = jnp.tanh(gx[:, 2 * hp:] + resetgate * h_n)

    hy = newgate + inputgate * (h_f32 - newgate)
    out_ref[...] = hy.astype(out_ref.dtype)


# ----------------------------------------------------------------------------- wrapper
def structured_rnn_forward(x, hidden, params, *, tile_b_max=256):
    """x: (B, input_size), hidden: (B, H), params from prepare_params."""
    wx, bx, wh, bh_n = params
    B, I = x.shape
    H = hidden.shape[1]
    Hp = wh.shape[0]                               # padded hidden (multiple of 128)

    # ---- batch tile selection -------------------------------------------------
    # Multiple of 16 sublanes (bf16-friendly); aim for >= 2 grid steps when the
    # batch allows it so dimension_semantics=("parallel",) can shard across
    # v7x's two TensorCores. (On 1-TC chips the extra step costs ~0.35 us.)
    b8 = _round_up(B, 8)
    if b8 >= 16:
        tile_b = min(tile_b_max, _round_up(pl.cdiv(b8, 2), 16))
    else:
        tile_b = b8

    # ---- VMEM accounting -------------------------------------------------------
    # Resident, single-buffered weights/biases (counted once).
    w_bytes = wx.size * 2 + wh.size * 2 + bx.size * 4 + bh_n.size * 4

    def act_bytes(tb):
        # double-buffered x (bf16) / h (f32) / out (f32) tiles + in-kernel f32
        # intermediates (gx, gh = 6*Hp widths; ri = 2; newgate/hy = 2).
        return 2 * tb * (I * 2 + Hp * 4 + Hp * 4) + 10 * tb * Hp * 4

    try:
        vmem_cap = pltpu.get_tpu_info().vmem_capacity_bytes
    except Exception:
        vmem_cap = 64 * 2**20                      # conservative (v7x per-core)
    cap = int(0.75 * vmem_cap)                     # leave compiler scratch headroom

    if w_bytes + 2 * 2**20 > cap:
        # TODO(synk): gate-axis (N) weight tiling would handle this gracefully.
        raise ValueError(
            f"resident fused weights ({w_bytes >> 20} MiB) exceed the VMEM budget "
            f"({cap >> 20} MiB); hidden size too large for the resident-weight layout")

    # Shrink tile_b if the activation working set would overflow VMEM.
    while tile_b > 16 and w_bytes + act_bytes(tile_b) > cap:
        tile_b = max(16, _round_up(tile_b // 2, 16))

    Bp = _round_up(B, tile_b)
    n_tiles = Bp // tile_b
    budget = w_bytes + act_bytes(tile_b)
    vmem_limit = int(min(cap, max(16 * 2**20, int(1.2 * budget))))

    # ---- activation staging (skip pads when shapes already line up) -----------
    x_bf = x.astype(jnp.bfloat16)                  # x is only used by the bf16 MXU
    if Bp != B:
        x_bf = jnp.pad(x_bf, ((0, Bp - B), (0, 0)))
    h_f = hidden.astype(jnp.float32)
    if Bp != B or Hp != H:
        h_f = jnp.pad(h_f, ((0, Bp - B), (0, Hp - H)))

    # ---- cost hint for XLA scheduling ------------------------------------------
    cost = pl.CostEstimate(
        flops=int(2 * Bp * (I + Hp) * 3 * Hp),
        transcendentals=int(3 * Bp * Hp),
        bytes_accessed=int(Bp * I * 2 + Bp * Hp * 4 + w_bytes + Bp * Hp * 4),
    )

    out = pl.pallas_call(
        gru_cell_kernel,
        out_shape=jax.ShapeDtypeStruct((Bp, Hp), jnp.float32),
        grid_spec=pltpu.PrefetchScalarGridSpec(
            num_scalar_prefetch=0,
            grid=(n_tiles,),
            in_specs=[
                pl.BlockSpec((tile_b, I), lambda i: (i, 0)),      # x tile (bf16)
                pl.BlockSpec((tile_b, Hp), lambda i: (i, 0)),     # h tile (f32)
                _resident_spec((I, 3 * Hp)),                      # wx (resident, 1-buf)
                _resident_spec((1, 3 * Hp)),                      # bx (+ folded bh_r/i)
                _resident_spec((Hp, 3 * Hp)),                     # wh (resident, 1-buf)
                _resident_spec((1, Hp)),                          # bh_n
            ],
            out_specs=pl.BlockSpec((tile_b, Hp), lambda i: (i, 0)),
        ),
        compiler_params=pltpu.CompilerParams(
            dimension_semantics=("parallel",),     # megacore sharding on v7x
            vmem_limit_bytes=vmem_limit,
        ),
        cost_estimate=cost,
    )(x_bf, h_f, wx, bx, wh, bh_n)

    return out[:B, :H]


# ----------------------------------------------------------------------------- params
def init_torch_params(key, input_size, hidden_size):
    """Deterministic init mirroring torch.nn.Linear(in, 3*hidden) layouts."""
    k1, k2, k3, k4 = jax.random.split(key, 4)
    bx = 1.0 / float(input_size) ** 0.5
    bh = 1.0 / float(hidden_size) ** 0.5
    w_x2h = jax.random.uniform(k1, (3 * hidden_size, input_size),
                               minval=-bx, maxval=bx, dtype=jnp.float32)
    b_x2h = jax.random.uniform(k2, (3 * hidden_size,),
                               minval=-bx, maxval=bx, dtype=jnp.float32)
    w_h2h = jax.random.uniform(k3, (3 * hidden_size, hidden_size),
                               minval=-bh, maxval=bh, dtype=jnp.float32)
    b_h2h = jax.random.uniform(k4, (3 * hidden_size,),
                               minval=-bh, maxval=bh, dtype=jnp.float32)
    return w_x2h, b_x2h, w_h2h, b_h2h


def prepare_params(w_x2h, b_x2h, w_h2h, b_h2h, hidden_size):
    """Torch Linear layout -> fused, lane-padded kernel layout.

    Weights become (K, 3*Hp) bf16 with columns [r | i | n], each gate padded to
    Hp = round_up(H, 128) lanes. The r/i halves of the h2h bias are folded into
    the x2h bias (their sum feeds a sigmoid directly); the n-gate h2h bias is
    kept separate as (1, Hp) so it is applied to h_n before the reset multiply.
    """
    H = hidden_size
    Hp = _round_up(H, LANE)

    def fuse_w(w):                                   # w: (3H, K) torch layout
        K = w.shape[1]
        wg = jnp.transpose(w.reshape(3, H, K), (0, 2, 1))     # (3, K, H)
        wg = jnp.pad(wg, ((0, 0), (0, 0), (0, Hp - H)))       # (3, K, Hp)
        return jnp.transpose(wg, (1, 0, 2)).reshape(K, 3 * Hp)

    def fuse_b(b):                                   # b: (3H,)
        bg = jnp.pad(b.reshape(3, H), ((0, 0), (0, Hp - H)))
        return bg.reshape(1, 3 * Hp).astype(jnp.float32)

    wx = fuse_w(w_x2h).astype(jnp.bfloat16)                    # (input_size, 3*Hp)
    wh = jnp.pad(fuse_w(w_h2h), ((0, Hp - H), (0, 0))).astype(jnp.bfloat16)  # (Hp, 3*Hp)

    bx_full = fuse_b(b_x2h)
    bh_full = fuse_b(b_h2h)
    bx = bx_full.at[:, : 2 * Hp].add(bh_full[:, : 2 * Hp])     # fold bh_r / bh_i
    bh_n = bh_full[:, 2 * Hp:]                                 # (1, Hp)
    return wx, bx, wh, bh_n


# ----------------------------------------------------------------------------- references
def reference_forward_f32(x, hidden, w_x2h, b_x2h, w_h2h, b_h2h):
    """Pure-f32 JAX reference matching the PyTorch module semantics."""
    gate_x = x @ w_x2h.T + b_x2h
    gate_h = hidden @ w_h2h.T + b_h2h
    i_r, i_i, i_n = jnp.split(gate_x, 3, axis=-1)
    h_r, h_i, h_n = jnp.split(gate_h, 3, axis=-1)
    resetgate = jax.nn.sigmoid(i_r + h_r)
    inputgate = jax.nn.sigmoid(i_i + h_i)
    newgate = jnp.tanh(i_n + resetgate * h_n)
    return newgate + inputgate * (hidden - newgate)


def reference_forward_bf16(x, hidden, params, H):
    """Reference with the same bf16-matmul quantization / bias folding the kernel uses."""
    wx, bx, wh, bh_n = params
    Hp = wh.shape[0]
    h_p = jnp.pad(hidden.astype(jnp.float32), ((0, 0), (0, Hp - H)))
    gx = jnp.dot(x.astype(jnp.bfloat16), wx, preferred_element_type=jnp.float32) + bx
    gh = jnp.dot(h_p.astype(jnp.bfloat16), wh, preferred_element_type=jnp.float32)
    i_r, i_i, i_n = (gx[:, g * Hp: g * Hp + H] for g in range(3))
    h_r, h_i = gh[:, :H], gh[:, Hp:Hp + H]
    h_n = gh[:, 2 * Hp: 2 * Hp + H] + bh_n[:, :H]
    resetgate = jax.nn.sigmoid(i_r + h_r)
    inputgate = jax.nn.sigmoid(i_i + h_i)
    newgate = jnp.tanh(i_n + resetgate * h_n)
    return newgate + inputgate * (hidden - newgate)


# ----------------------------------------------------------------------------- main
if __name__ == "__main__":
    B, INPUT_SIZE, HIDDEN_SIZE = 2, 16, 32

    key = jax.random.PRNGKey(0)
    kx, kh, kp = jax.random.split(key, 3)

    x = jax.random.normal(kx, (B, INPUT_SIZE), dtype=jnp.float32)
    hidden = jax.random.normal(kh, (B, HIDDEN_SIZE), dtype=jnp.float32)

    w_x2h, b_x2h, w_h2h, b_h2h = init_torch_params(kp, INPUT_SIZE, HIDDEN_SIZE)
    params = prepare_params(w_x2h, b_x2h, w_h2h, b_h2h, HIDDEN_SIZE)

    hy = structured_rnn_forward(x, hidden, params)
    hy = jax.block_until_ready(hy)

    ref_bf16 = reference_forward_bf16(x, hidden, params, HIDDEN_SIZE)
    ref_f32 = reference_forward_f32(x, hidden, w_x2h, b_x2h, w_h2h, b_h2h)

    assert hy.shape == (B, HIDDEN_SIZE)
    assert jnp.allclose(hy, ref_bf16, atol=1e-4, rtol=1e-4), "mismatch vs bf16-matched reference"
    assert jnp.allclose(hy, ref_f32, atol=5e-2, rtol=5e-2), "mismatch vs f32 torch-semantics reference"

    print("KERNEL_OK")
</pallas_src>

<mosaic_0001>
module attributes {stable_mosaic.version = 11 : i64} {
  func.func @gru_cell_kernel(%arg0: i32, %arg1: memref<8x16xbf16, #tpu.memory_space<vmem>>, %arg2: memref<8x128xf32, #tpu.memory_space<vmem>>, %arg3: memref<16x384xbf16, #tpu.memory_space<vmem>>, %arg4: memref<1x384xf32, #tpu.memory_space<vmem>>, %arg5: memref<128x384xbf16, #tpu.memory_space<vmem>>, %arg6: memref<1x128xf32, #tpu.memory_space<vmem>>, %arg7: memref<8x128xf32, #tpu.memory_space<vmem>>) attributes {dimension_semantics = [#tpu.dimension_semantics<parallel>], iteration_bounds = array<i64: 1>, scalar_prefetch = 0 : i64, scratch_operands = 0 : i64, tpu.core_type = #tpu.core_type<tc>, window_params = [{transform_indices = @transform_0, window_bounds = array<i64: 8, 16>}, {transform_indices = @transform_1, window_bounds = array<i64: 8, 128>}, {pipeline_mode = #tpu.pipeline_mode<synchronous>, transform_indices = @transform_2, window_bounds = array<i64: 16, 384>}, {pipeline_mode = #tpu.pipeline_mode<synchronous>, transform_indices = @transform_3, window_bounds = array<i64: 1, 384>}, {pipeline_mode = #tpu.pipeline_mode<synchronous>, transform_indices = @transform_4, window_bounds = array<i64: 128, 384>}, {pipeline_mode = #tpu.pipeline_mode<synchronous>, transform_indices = @transform_5, window_bounds = array<i64: 1, 128>}, {transform_indices = @transform_6, window_bounds = array<i64: 8, 128>}]} {
    %c0 = arith.constant 0 : index
    %c0_0 = arith.constant 0 : index
    %0 = vector.load %arg2[%c0, %c0_0] : memref<8x128xf32, #tpu.memory_space<vmem>>, vector<8x128xf32>
    %c0_1 = arith.constant 0 : index
    %c0_2 = arith.constant 0 : index
    %1 = vector.load %arg1[%c0_1, %c0_2] : memref<8x16xbf16, #tpu.memory_space<vmem>>, vector<8x16xbf16>
    %c0_3 = arith.constant 0 : index
    %c0_4 = arith.constant 0 : index
    %2 = vector.load %arg3[%c0_3, %c0_4] : memref<16x384xbf16, #tpu.memory_space<vmem>>, vector<16x384xbf16>
    %cst = arith.constant dense<0.000000e+00> : vector<8x384xf32>
    %3 = tpu.matmul %1, %2, %cst {dimension_numbers = #tpu.dot_dimension_numbers<[1], [0], [0], [1], [0, 0, 1, 1], [], []>} : vector<8x16xbf16>, vector<16x384xbf16>, vector<8x384xf32> -> vector<8x384xf32>
    %c0_5 = arith.constant 0 : index
    %c0_6 = arith.constant 0 : index
    %4 = vector.load %arg4[%c0_5, %c0_6] : memref<1x384xf32, #tpu.memory_space<vmem>>, vector<1x384xf32>
    %5 = vector.broadcast %4 : vector<1x384xf32> to vector<8x384xf32>
    %6 = arith.addf %3, %5 : vector<8x384xf32>
    %7 = arith.truncf %0 : vector<8x128xf32> to vector<8x128xbf16>
    %c0_7 = arith.constant 0 : index
    %c0_8 = arith.constant 0 : index
    %8 = vector.load %arg5[%c0_7, %c0_8] : memref<128x384xbf16, #tpu.memory_space<vmem>>, vector<128x384xbf16>
    %cst_9 = arith.constant dense<0.000000e+00> : vector<8x384xf32>
    %9 = tpu.matmul %7, %8, %cst_9 {dimension_numbers = #tpu.dot_dimension_numbers<[1], [0], [0], [1], [0, 0, 1, 1], [], []>} : vector<8x128xbf16>, vector<128x384xbf16>, vector<8x384xf32> -> vector<8x384xf32>
    %10 = vector.extract_strided_slice %6 {offsets = [0, 0], sizes = [8, 256], strides = [1, 1]} : vector<8x384xf32> to vector<8x256xf32>
    %11 = vector.extract_strided_slice %9 {offsets = [0, 0], sizes = [8, 256], strides = [1, 1]} : vector<8x384xf32> to vector<8x256xf32>
    %12 = arith.addf %10, %11 : vector<8x256xf32>
    %13 = arith.negf %12 : vector<8x256xf32>
    %14 = math.exp %13 : vector<8x256xf32>
    %cst_10 = arith.constant 1.000000e+00 : f32
    %15 = vector.broadcast %cst_10 : f32 to vector<8x256xf32>
    %16 = arith.addf %15, %14 : vector<8x256xf32>
    %17 = arith.divf %15, %16 : vector<8x256xf32>
    %18 = vector.extract_strided_slice %17 {offsets = [0, 0], sizes = [8, 128], strides = [1, 1]} : vector<8x256xf32> to vector<8x128xf32>
    %19 = vector.extract_strided_slice %17 {offsets = [0, 128], sizes = [8, 128], strides = [1, 1]} : vector<8x256xf32> to vector<8x128xf32>
    %20 = vector.extract_strided_slice %9 {offsets = [0, 256], sizes = [8, 128], strides = [1, 1]} : vector<8x384xf32> to vector<8x128xf32>
    %c0_11 = arith.constant 0 : index
    %c0_12 = arith.constant 0 : index
    %21 = vector.load %arg6[%c0_11, %c0_12] : memref<1x128xf32, #tpu.memory_space<vmem>>, vector<1x128xf32>
    %22 = vector.broadcast %21 : vector<1x128xf32> to vector<8x128xf32>
    %23 = arith.addf %20, %22 : vector<8x128xf32>
    %24 = vector.extract_strided_slice %6 {offsets = [0, 256], sizes = [8, 128], strides = [1, 1]} : vector<8x384xf32> to vector<8x128xf32>
    %25 = arith.mulf %18, %23 : vector<8x128xf32>
    %26 = arith.addf %24, %25 : vector<8x128xf32>
    %27 = math.tanh %26 : vector<8x128xf32>
    %28 = arith.subf %0, %27 : vector<8x128xf32>
    %29 = arith.mulf %19, %28 : vector<8x128xf32>
    %30 = arith.addf %27, %29 : vector<8x128xf32>
    %c0_13 = arith.constant 0 : index
    %c0_14 = arith.constant 0 : index
    %31 = vector.load %arg7[%c0_13, %c0_14] : memref<8x128xf32, #tpu.memory_space<vmem>>, vector<8x128xf32>
    tpu.vector_store %arg7[%c0_13, %c0_14], %30 {strides = array<i32>} : memref<8x128xf32, #tpu.memory_space<vmem>>, vector<8x128xf32>,
    return
  }
  func.func @transform_0(%arg0: i32) -> (i32, i32) {
    %c0_i32 = arith.constant 0 : i32
    %c0_i32_0 = arith.constant 0 : i32
    return %arg0, %c0_i32 : i32, i32
  }
  func.func @transform_1(%arg0: i32) -> (i32, i32) {
    %c0_i32 = arith.constant 0 : i32
    %c0_i32_0 = arith.constant 0 : i32
    return %arg0, %c0_i32 : i32, i32
  }
  func.func @transform_2(%arg0: i32) -> (i32, i32) {
    %c0_i32 = arith.constant 0 : i32
    %c0_i32_0 = arith.constant 0 : i32
    %c0_i32_1 = arith.constant 0 : i32
    return %c0_i32, %c0_i32_0 : i32, i32
  }
  func.func @transform_3(%arg0: i32) -> (i32, i32) {
    %c0_i32 = arith.constant 0 : i32
    %c0_i32_0 = arith.constant 0 : i32
    %c0_i32_1 = arith.constant 0 : i32
    return %c0_i32, %c0_i32_0 : i32, i32
  }
  func.func @transform_4(%arg0: i32) -> (i32, i32) {
    %c0_i32 = arith.constant 0 : i32
    %c0_i32_0 = arith.constant 0 : i32
    %c0_i32_1 = arith.constant 0 : i32
    return %c0_i32, %c0_i32_0 : i32, i32
  }
  func.func @transform_5(%arg0: i32) -> (i32, i32) {
    %c0_i32 = arith.constant 0 : i32
    %c0_i32_0 = arith.constant 0 : i32
    %c0_i32_1 = arith.constant 0 : i32
    return %c0_i32, %c0_i32_0 : i32, i32
  }
  func.func @transform_6(%arg0: i32) -> (i32, i32) {
    %c0_i32 = arith.constant 0 : i32
    %c0_i32_0 = arith.constant 0 : i32
    return %arg0, %c0_i32 : i32, i32
  }
}

</mosaic_0001>

<llo_original>
// kernel: tpu_custom_call.1
$region0: #{tpu_custom_call.1}
  #allocation0 [shape = 'u32[]', space=smem, size = 0x4, offset = 0x4, fixed_abs, tag = 'smem constant byte address 0x4 - core index']
  #allocation1 [shape = 'u32[144,128]{1,0:T(1,128)}', space=vmem, size = 0x12000, scoped, tag = 'internal scratch']
  %s0 = inlined_call_operand.hbm [shape: bf16[8,16], index: 0, kind: input, shape index: {}]
  %s1 = inlined_call_operand.hbm [shape: f32[8,128], index: 1, kind: input, shape index: {}]
  %s2 = inlined_call_operand.hbm [shape: bf16[16,384], index: 2, kind: input, shape index: {}]
  %s3 = inlined_call_operand.vmem [shape: f32[1,384], index: 3, kind: input, shape index: {}]
  %s4 = inlined_call_operand.hbm [shape: bf16[128,384], index: 4, kind: input, shape index: {}]
  %s5 = inlined_call_operand.vmem [shape: f32[1,128], index: 5, kind: input, shape index: {}]
  %s6 = inlined_call_operand.hbm [shape: f32[8,128], index: 6, kind: output, shape index: {}]
  %s7 = sld [smem:[#allocation0]]
  $region50: #{tpu_custom_call.1} parent=0
    _
  %s9 = ssub.s32 1, %s7
  %s10 = scalar_select 0, %s9, %s7
  $region1: #{tpu_custom_call.1} parent=0
    #allocation2 [shape = 'u8[2048]{0}', space=vmem, size = 0x800, scoped, tag = 'input window, operand 0, single buffered']
    #allocation3 [shape = 's32[1]{0}', space=sflag, size = 0x4, scoped, tag = 'scoped memory for tpu_custom_call.1']
    #allocation4 [shape = 's32[1]{0}', space=sflag, size = 0x4, scoped, tag = 'scoped memory for tpu_custom_call.1']
    #allocation5 [shape = 'u8[4096]{0}', space=vmem, size = 0x1000, scoped, tag = 'input window, operand 1, single buffered']
    #allocation6 [shape = 's32[1]{0}', space=sflag, size = 0x4, scoped, tag = 'scoped memory for tpu_custom_call.1']
    #allocation7 [shape = 'u8[12288]{0}', space=vmem, size = 0x3000, scoped, tag = 'input window, operand 2, single buffered']
    #allocation8 [shape = 'u8[98304]{0}', space=vmem, size = 0x18000, scoped, tag = 'input window, operand 4, single buffered']
    #allocation9 [shape = 's32[1]{0}', space=sflag, size = 0x4, scoped, tag = 'scoped memory for tpu_custom_call.1']
    #allocation10 [shape = 'u8[4096]{0}', space=vmem, size = 0x1000, scoped, tag = 'output window, operand 0, single buffered']
    %11 = vsyncpa [#allocation3], 0
    %12 = vsyncpa [#allocation6], 0
    %13 = vsyncpa [#allocation9], 0
    %14 = vsyncpa [#allocation4], 0
    // Predicated region
    $region2: #{tpu_custom_call.1} parent=1 // pred_check
      _
    $region3: #{tpu_custom_call.1} parent=1 // pred_check_branch
      %16 = sbr.rel (0) target = $region5
    $region4: #{tpu_custom_call.1} parent=1 // pred_region
      %s18 = ssub.s32 64, 64
      %19 = vsyncadd [#allocation3], %s18
      %s21 = sshll.u32 [#allocation2], 4
      %s22 = int_to_ptr.vmem [resolvable:$true] %s21
      %24 = dma.hbm_to_vmem [thread:$0]  %s0, 64, %s22, [#allocation3]
    $region5: #{tpu_custom_call.1} parent=1 // pred_fallthru
      _
    // Predicated region
    $region6: #{tpu_custom_call.1} parent=1 // pred_check
      _
    $region7: #{tpu_custom_call.1} parent=1 // pred_check_branch
      %26 = sbr.rel (0) target = $region9
    $region8: #{tpu_custom_call.1} parent=1 // pred_region
      %s28 = ssub.s32 128, 128
      %29 = vsyncadd [#allocation6], %s28
      %s31 = sshll.u32 [#allocation5], 4
      %s32 = int_to_ptr.vmem [resolvable:$true] %s31
      %34 = dma.hbm_to_vmem [thread:$0]  %s1, 128, %s32, [#allocation6]
    $region9: #{tpu_custom_call.1} parent=1 // pred_fallthru
      _
    // Predicated region
    $region10: #{tpu_custom_call.1} parent=1 // pred_check
      _
    $region11: #{tpu_custom_call.1} parent=1 // pred_check_branch
      %36 = sbr.rel (0) target = $region13
    $region12: #{tpu_custom_call.1} parent=1 // pred_region
      %s38 = ssub.s32 384, 384
      %39 = vsyncadd [#allocation6], %s38
      %s40 = sshll.u32 [#allocation7], 4
      %s41 = int_to_ptr.vmem [resolvable:$true] %s40
      %46 = dma.hbm_to_vmem [thread:$0]  %s2, 384, %s41, [#allocation6], 192, 192, 12
    $region13: #{tpu_custom_call.1} parent=1 // pred_fallthru
      _
    // Predicated region
    $region14: #{tpu_custom_call.1} parent=1 // pred_check
      _
    $region15: #{tpu_custom_call.1} parent=1 // pred_check_branch
      %48 = sbr.rel (0) target = $region17
    $region16: #{tpu_custom_call.1} parent=1 // pred_region
      _
    $region17: #{tpu_custom_call.1} parent=1 // pred_fallthru
      _
    // Predicated region
    $region18: #{tpu_custom_call.1} parent=1 // pred_check
      _
    $region19: #{tpu_custom_call.1} parent=1 // pred_check_branch
      %50 = sbr.rel (0) target = $region21
    $region20: #{tpu_custom_call.1} parent=1 // pred_region
      %s52 = ssub.s32 3072, 3072
      %53 = vsyncadd [#allocation9], %s52
      %s54 = sshll.u32 [#allocation8], 4
      %s55 = int_to_ptr.vmem [resolvable:$true] %s54
      %60 = dma.hbm_to_vmem [thread:$0]  %s4, 3072, %s55, [#allocation9], 192, 192, 12
    $region21: #{tpu_custom_call.1} parent=1 // pred_fallthru
      _
    // Predicated region
    $region22: #{tpu_custom_call.1} parent=1 // pred_check
      _
    $region23: #{tpu_custom_call.1} parent=1 // pred_check_branch
      %62 = sbr.rel (0) target = $region25
    $region24: #{tpu_custom_call.1} parent=1 // pred_region
      _
    $region25: #{tpu_custom_call.1} parent=1 // pred_fallthru
      _
    // Predicated region
    $region26: #{tpu_custom_call.1} parent=1 // pred_check
      _
    $region27: #{tpu_custom_call.1} parent=1 // pred_check_branch
      %64 = sbr.rel (0) target = $region29
    $region28: #{tpu_custom_call.1} parent=1 // pred_region
      %65 = dma.done [#allocation3], 64
    $region29: #{tpu_custom_call.1} parent=1 // pred_fallthru
      _
    // Predicated region
    $region30: #{tpu_custom_call.1} parent=1 // pred_check
      _
    $region31: #{tpu_custom_call.1} parent=1 // pred_check_branch
      %67 = sbr.rel (0) target = $region33
    $region32: #{tpu_custom_call.1} parent=1 // pred_region
      %68 = dma.done [#allocation6], 128
    $region33: #{tpu_custom_call.1} parent=1 // pred_fallthru
      _
    // Predicated region
    $region34: #{tpu_custom_call.1} parent=1 // pred_check
      _
    $region35: #{tpu_custom_call.1} parent=1 // pred_check_branch
      %70 = sbr.rel (0) target = $region37
    $region36: #{tpu_custom_call.1} parent=1 // pred_region
      %71 = dma.done [#allocation6], 384
    $region37: #{tpu_custom_call.1} parent=1 // pred_fallthru
      _
    // Predicated region
    $region38: #{tpu_custom_call.1} parent=1 // pred_check
      _
    $region39: #{tpu_custom_call.1} parent=1 // pred_check_branch
      %73 = sbr.rel (0) target = $region41
    $region40: #{tpu_custom_call.1} parent=1 // pred_region
      %74 = dma.done [#allocation9], 3072
    $region41: #{tpu_custom_call.1} parent=1 // pred_fallthru
      _
    %v76 = vld [vmem:[#allocation5] sm:$0xff]
    %v77 = vld [vmem:[#allocation2] sm:$0xf]
    %v78 = vld [vmem:[#allocation7] sm:$0xff]
    %v79 = vld [vmem:[#allocation7 + $0x8] sm:$0xf]
    %v80 = vld [vmem:[#allocation7 + $0xc] sm:$0xff]
    %v81 = vld [vmem:[#allocation7 + $0x14] sm:$0xf]
    %v82 = vld [vmem:[%s3] sm:$0x7]
    %v84 = vlaneseq
    %v85 = vshrl.u32 %v84, 7
    %v86 = vsub.s32 0, %v85
    %v87 = vrot.slane %v82, %v86
    %v88 = vlaneseq
    %v89 = vshrl.u32 %v88, 7
    %v90 = vsub.s32 1, %v89
    %v91 = vrot.slane %v82, %v90
    %v92 = vlaneseq
    %v93 = vshrl.u32 %v92, 7
    %v94 = vsub.s32 2, %v93
    %v95 = vrot.slane %v82, %v94
    %v103 = vunpack.c.l.b16 %v78
    %v104 = vunpack.c.h.b16 %v78
    %v105 = vunpack.c.l.b16 %v79
    %v106 = vunpack.c.l.b16 %v80
    %v107 = vunpack.c.h.b16 %v80
    %v108 = vunpack.c.l.b16 %v81
    %v109 = vpack.c.b16 %v106, %v103
    %v110 = vpack.c.b16 %v107, %v104
    %v111 = vpack.c.b16 %v108, %v105
    %vm115 = vcmask 130048
    %v117 = vsel %vm115, %v77, 0
    %119 = vmatprep.subr.bf16.mxu0 0
    %120 = vmatpush1.bf16.msra.mxu0 0
    %121 = vmatprep.subr.bf16.mxu0 0
    %122 = vmatpush1.bf16.msra.mxu0 0
    %123 = vmatprep.subr.bf16.mxu0 0
    %124 = vmatpush1.bf16.msra.mxu0 0
    %125 = vmatprep.subr.bf16.mxu0 0
    %126 = vmatpush1.bf16.msra.mxu0 0
    %127 = vmatprep.subr.bf16.mxu0 0
    %128 = vmatpush1.bf16.msra.mxu0 0
    %129 = vmatprep.subr.bf16.mxu0 0
    %130 = vmatpush1.bf16.msra.mxu0 0
    %131 = vmatprep.subr.bf16.mxu0 0
    %132 = vmatpush1.bf16.msra.mxu0 0
    %133 = vmatprep.subr.bf16.mxu0 %v110
    %134 = vmatpush1.bf16.msra.mxu0 %v109
    %135 = vmatprep.subr.bf16.mxu0 0
    %136 = vmatpush2.bf16.msra.mxu0 0
    %137 = vmatprep.subr.bf16.mxu0 0
    %138 = vmatpush2.bf16.msra.mxu0 0
    %139 = vmatprep.subr.bf16.mxu0 0
    %140 = vmatpush2.bf16.msra.mxu0 0
    %141 = vmatprep.subr.bf16.mxu0 0
    %142 = vmatpush2.bf16.msra.mxu0 0
    %143 = vmatprep.subr.bf16.mxu0 0
    %144 = vmatpush2.bf16.msra.mxu0 0
    %145 = vmatprep.subr.bf16.mxu0 0
    %146 = vmatpush2.bf16.msra.mxu0 0
    %147 = vmatprep.subr.bf16.mxu0 0
    %148 = vmatpush2.bf16.msra.mxu0 0
    %149 = vmatprep.subr.bf16.mxu0 0
    %150 = vmatpush2.bf16.msra.mxu0 0
    %151 = vmatprep.mubr.bf16.mxu0 0
    %152 = vmatmul.mubr.bf16.gmra.mxu0 %v117
    %v153 = vpop.f32.mrf.mxu0
    %v154 = vadd.f32 %v87, %v153
    %v155 = vpop.f32.mrf.mxu0
    %v156 = vadd.f32 %v91, %v155
    %v157 = vpop.f32.mrf.mxu0
    %v158 = vpop.f32.mrf.mxu0
    %159 = vdwg.mxu0
    %160 = vmatprep.subr.bf16.mxu0 0
    %161 = vmatpush1.bf16.msra.mxu0 0
    %162 = vmatprep.subr.bf16.mxu0 0
    %163 = vmatpush1.bf16.msra.mxu0 0
    %164 = vmatprep.subr.bf16.mxu0 0
    %165 = vmatpush1.bf16.msra.mxu0 0
    %166 = vmatprep.subr.bf16.mxu0 0
    %167 = vmatpush1.bf16.msra.mxu0 0
    %168 = vmatprep.subr.bf16.mxu0 0
    %169 = vmatpush1.bf16.msra.mxu0 0
    %170 = vmatprep.subr.bf16.mxu0 0
    %171 = vmatpush1.bf16.msra.mxu0 0
    %172 = vmatprep.subr.bf16.mxu0 0
    %173 = vmatpush1.bf16.msra.mxu0 0
    %174 = vmatprep.subr.bf16.mxu0 0
    %175 = vmatpush1.bf16.msra.mxu0 %v111
    %176 = vmatprep.subr.bf16.mxu0 0
    %177 = vmatpush2.bf16.msra.mxu0 0
    %178 = vmatprep.subr.bf16.mxu0 0
    %179 = vmatpush2.bf16.msra.mxu0 0
    %180 = vmatprep.subr.bf16.mxu0 0
    %181 = vmatpush2.bf16.msra.mxu0 0
    %182 = vmatprep.subr.bf16.mxu0 0
    %183 = vmatpush2.bf16.msra.mxu0 0
    %184 = vmatprep.subr.bf16.mxu0 0
    %185 = vmatpush2.bf16.msra.mxu0 0
    %186 = vmatprep.subr.bf16.mxu0 0
    %187 = vmatpush2.bf16.msra.mxu0 0
    %188 = vmatprep.subr.bf16.mxu0 0
    %189 = vmatpush2.bf16.msra.mxu0 0
    %190 = vmatprep.subr.bf16.mxu0 0
    %191 = vmatpush2.bf16.msra.mxu0 0
    %192 = vmatprep.mubr.bf16.mxu0 0
    %193 = vmatmul.mubr.bf16.gmra.mxu0 %v117
    %v194 = vpop.f32.mrf.mxu0
    %v195 = vadd.f32 %v95, %v194
    %v196 = vpop.f32.mrf.mxu0
    %v197 = vpop.f32.mrf.mxu0
    %v198 = vpop.f32.mrf.mxu0
    %199 = vdwg.mxu0
    %v200 = vpack.c.bf16 %v76, %v76
    %v201 = vld [vmem:[#allocation8] sm:$0xff]
    %v202 = vld [vmem:[#allocation8 + $0x8] sm:$0xf]
    %v203 = vld [vmem:[#allocation8 + $0xc] sm:$0xff]
    %v204 = vld [vmem:[#allocation8 + $0x14] sm:$0xf]
    %v205 = vld [vmem:[#allocation8 + $0x18] sm:$0xff]
    %v206 = vld [vmem:[#allocation8 + $0x20] sm:$0xf]
    %v207 = vld [vmem:[#allocation8 + $0x24] sm:$0xff]
    %v208 = vld [vmem:[#allocation8 + $0x2c] sm:$0xf]
    %v209 = vld [vmem:[#allocation8 + $0x30] sm:$0xff]
    %v210 = vld [vmem:[#allocation8 + $0x38] sm:$0xf]
    %v211 = vld [vmem:[#allocation8 + $0x3c] sm:$0xff]
    %v212 = vld [vmem:[#allocation8 + $0x44] sm:$0xf]
    %v213 = vld [vmem:[#allocation8 + $0x48] sm:$0xff]
    %v214 = vld [vmem:[#allocation8 + $0x50] sm:$0xf]
    %v215 = vld [vmem:[#allocation8 + $0x54] sm:$0xff]
    %v216 = vld [vmem:[#allocation8 + $0x5c] sm:$0xf]
    %v217 = vld [vmem:[#allocation8 + $0x60] sm:$0xff]
    %v218 = vld [vmem:[#allocation8 + $0x68] sm:$0xf]
    %v219 = vld [vmem:[#allocation8 + $0x6c] sm:$0xff]
    %v220 = vld [vmem:[#allocation8 + $0x74] sm:$0xf]
    %v221 = vld [vmem:[#allocation8 + $0x78] sm:$0xff]
    %v222 = vld [vmem:[#allocation8 + $0x80] sm:$0xf]
    %v223 = vld [vmem:[#allocation8 + $0x84] sm:$0xff]
    %v224 = vld [vmem:[#allocation8 + $0x8c] sm:$0xf]
    %v225 = vld [vmem:[#allocation8 + $0x90] sm:$0xff]
    %v226 = vld [vmem:[#allocation8 + $0x98] sm:$0xf]
    %v227 = vld [vmem:[#allocation8 + $0x9c] sm:$0xff]
    %v228 = vld [vmem:[#allocation8 + $0xa4] sm:$0xf]
    %v229 = vld [vmem:[#allocation8 + $0xa8] sm:$0xff]
    %v230 = vld [vmem:[#allocation8 + $0xb0] sm:$0xf]
    %v231 = vld [vmem:[#allocation8 + $0xb4] sm:$0xff]
    %v232 = vld [vmem:[#allocation8 + $0xbc] sm:$0xf]
    %v265 = vunpack.c.l.b16 %v201
    %v266 = vunpack.c.h.b16 %v201
    %v267 = vunpack.c.l.b16 %v202
    %v268 = vunpack.c.l.b16 %v203
    %v269 = vunpack.c.h.b16 %v203
    %v270 = vunpack.c.l.b16 %v204
    %v271 = vunpack.c.l.b16 %v205
    %v272 = vunpack.c.h.b16 %v205
    %v273 = vunpack.c.l.b16 %v206
    %v274 = vunpack.c.l.b16 %v207
    %v275 = vunpack.c.h.b16 %v207
    %v276 = vunpack.c.l.b16 %v208
    %v277 = vunpack.c.l.b16 %v209
    %v278 = vunpack.c.h.b16 %v209
    %v279 = vunpack.c.l.b16 %v210
    %v280 = vunpack.c.l.b16 %v211
    %v281 = vunpack.c.h.b16 %v211
    %v282 = vunpack.c.l.b16 %v212
    %v283 = vunpack.c.l.b16 %v213
    %v284 = vunpack.c.h.b16 %v213
    %v285 = vunpack.c.l.b16 %v214
    %v286 = vunpack.c.l.b16 %v215
    %v287 = vunpack.c.h.b16 %v215
    %v288 = vunpack.c.l.b16 %v216
    %v289 = vunpack.c.l.b16 %v217
    %v290 = vunpack.c.h.b16 %v217
    %v291 = vunpack.c.l.b16 %v218
    %v292 = vunpack.c.l.b16 %v219
    %v293 = vunpack.c.h.b16 %v219
    %v294 = vunpack.c.l.b16 %v220
    %v295 = vunpack.c.l.b16 %v221
    %v296 = vunpack.c.h.b16 %v221
    %v297 = vunpack.c.l.b16 %v222
    %v298 = vunpack.c.l.b16 %v223
    %v299 = vunpack.c.h.b16 %v223
    %v300 = vunpack.c.l.b16 %v224
    %v301 = vunpack.c.l.b16 %v225
    %v302 = vunpack.c.h.b16 %v225
    %v303 = vunpack.c.l.b16 %v226
    %v304 = vunpack.c.l.b16 %v227
    %v305 = vunpack.c.h.b16 %v227
    %v306 = vunpack.c.l.b16 %v228
    %v307 = vunpack.c.l.b16 %v229
    %v308 = vunpack.c.h.b16 %v229
    %v309 = vunpack.c.l.b16 %v230
    %v310 = vunpack.c.l.b16 %v231
    %v311 = vunpack.c.h.b16 %v231
    %v312 = vunpack.c.l.b16 %v232
    %v313 = vpack.c.b16 %v268, %v265
    %v314 = vpack.c.b16 %v269, %v266
    %v315 = vpack.c.b16 %v270, %v267
    %v316 = vpack.c.b16 %v274, %v271
    %v317 = vpack.c.b16 %v275, %v272
    %v318 = vpack.c.b16 %v276, %v273
    %v319 = vpack.c.b16 %v280, %v277
    %v320 = vpack.c.b16 %v281, %v278
    %v321 = vpack.c.b16 %v282, %v279
    %v322 = vpack.c.b16 %v286, %v283
    %v323 = vpack.c.b16 %v287, %v284
    %v324 = vpack.c.b16 %v288, %v285
    %v325 = vpack.c.b16 %v292, %v289
    %v326 = vpack.c.b16 %v293, %v290
    %v327 = vpack.c.b16 %v294, %v291
    %v328 = vpack.c.b16 %v298, %v295
    %v329 = vpack.c.b16 %v299, %v296
    %v330 = vpack.c.b16 %v300, %v297
    %v331 = vpack.c.b16 %v304, %v301
    %v332 = vpack.c.b16 %v305, %v302
    %v333 = vpack.c.b16 %v306, %v303
    %v334 = vpack.c.b16 %v310, %v307
    %v335 = vpack.c.b16 %v311, %v308
    %v336 = vpack.c.b16 %v312, %v309
    %361 = vmatprep.subr.bf16.mxu0 %v335
    %362 = vmatpush1.bf16.msra.mxu0 %v334
    %363 = vmatprep.subr.bf16.mxu0 %v332
    %364 = vmatpush1.bf16.msra.mxu0 %v331
    %365 = vmatprep.subr.bf16.mxu0 %v329
    %366 = vmatpush1.bf16.msra.mxu0 %v328
    %367 = vmatprep.subr.bf16.mxu0 %v326
    %368 = vmatpush1.bf16.msra.mxu0 %v325
    %369 = vmatprep.subr.bf16.mxu0 %v323
    %370 = vmatpush1.bf16.msra.mxu0 %v322
    %371 = vmatprep.subr.bf16.mxu0 %v320
    %372 = vmatpush1.bf16.msra.mxu0 %v319
    %373 = vmatprep.subr.bf16.mxu0 %v317
    %374 = vmatpush1.bf16.msra.mxu0 %v316
    %375 = vmatprep.subr.bf16.mxu0 %v314
    %376 = vmatpush1.bf16.msra.mxu0 %v313
    %377 = vmatprep.subr.bf16.mxu0 0
    %378 = vmatpush2.bf16.msra.mxu0 0
    %379 = vmatprep.subr.bf16.mxu0 0
    %380 = vmatpush2.bf16.msra.mxu0 0
    %381 = vmatprep.subr.bf16.mxu0 0
    %382 = vmatpush2.bf16.msra.mxu0 0
    %383 = vmatprep.subr.bf16.mxu0 0
    %384 = vmatpush2.bf16.msra.mxu0 0
    %385 = vmatprep.subr.bf16.mxu0 0
    %386 = vmatpush2.bf16.msra.mxu0 0
    %387 = vmatprep.subr.bf16.mxu0 0
    %388 = vmatpush2.bf16.msra.mxu0 0
    %389 = vmatprep.subr.bf16.mxu0 0
    %390 = vmatpush2.bf16.msra.mxu0 0
    %391 = vmatprep.subr.bf16.mxu0 0
    %392 = vmatpush2.bf16.msra.mxu0 0
    %393 = vmatprep.mubr.bf16.mxu0 0
    %394 = vmatmul.mubr.bf16.gmra.mxu0 %v200
    %v395 = vpop.f32.mrf.mxu0
    %v396 = vadd.f32 0.0, %v395
    %v397 = vpop.f32.mrf.mxu0
    %v398 = vadd.f32 0.0, %v397
    %v399 = vpop.f32.mrf.mxu0
    %v400 = vpop.f32.mrf.mxu0
    %401 = vdwg.mxu0
    %402 = vmatprep.subr.bf16.mxu0 0
    %403 = vmatpush1.bf16.msra.mxu0 %v336
    %404 = vmatprep.subr.bf16.mxu0 0
    %405 = vmatpush1.bf16.msra.mxu0 %v333
    %406 = vmatprep.subr.bf16.mxu0 0
    %407 = vmatpush1.bf16.msra.mxu0 %v330
    %408 = vmatprep.subr.bf16.mxu0 0
    %409 = vmatpush1.bf16.msra.mxu0 %v327
    %410 = vmatprep.subr.bf16.mxu0 0
    %411 = vmatpush1.bf16.msra.mxu0 %v324
    %412 = vmatprep.subr.bf16.mxu0 0
    %413 = vmatpush1.bf16.msra.mxu0 %v321
    %414 = vmatprep.subr.bf16.mxu0 0
    %415 = vmatpush1.bf16.msra.mxu0 %v318
    %416 = vmatprep.subr.bf16.mxu0 0
    %417 = vmatpush1.bf16.msra.mxu0 %v315
    %418 = vmatprep.subr.bf16.mxu0 0
    %419 = vmatpush2.bf16.msra.mxu0 0
    %420 = vmatprep.subr.bf16.mxu0 0
    %421 = vmatpush2.bf16.msra.mxu0 0
    %422 = vmatprep.subr.bf16.mxu0 0
    %423 = vmatpush2.bf16.msra.mxu0 0
    %424 = vmatprep.subr.bf16.mxu0 0
    %425 = vmatpush2.bf16.msra.mxu0 0
    %426 = vmatprep.subr.bf16.mxu0 0
    %427 = vmatpush2.bf16.msra.mxu0 0
    %428 = vmatprep.subr.bf16.mxu0 0
    %429 = vmatpush2.bf16.msra.mxu0 0
    %430 = vmatprep.subr.bf16.mxu0 0
    %431 = vmatpush2.bf16.msra.mxu0 0
    %432 = vmatprep.subr.bf16.mxu0 0
    %433 = vmatpush2.bf16.msra.mxu0 0
    %434 = vmatprep.mubr.bf16.mxu0 0
    %435 = vmatmul.mubr.bf16.gmra.mxu0 %v200
    %v436 = vpop.f32.mrf.mxu0
    %v437 = vadd.f32 0.0, %v436
    %v438 = vpop.f32.mrf.mxu0
    %v439 = vpop.f32.mrf.mxu0
    %v440 = vpop.f32.mrf.mxu0
    %441 = vdwg.mxu0
    %v442 = vadd.f32 %v154, %v396
    %v443 = vadd.f32 %v156, %v398
    %v444 = vxor.u32 %v442, 2147483648
    %v445 = vxor.u32 %v443, 2147483648
    %v446 = vmul.f32 %v444, 1.442695
    %v447 = vpow.pop %v446
    %v448 = vmul.f32 %v445, 1.442695
    %v449 = vpow.pop %v448
    %v450 = vadd.f32 %v447, 1.0
    %v451 = vadd.f32 %v449, 1.0
    %v452 = vrcp.pop %v450
    %v453 = vmul.f32 1.0, %v452
    %v454 = vrcp.pop %v451
    %v455 = vmul.f32 1.0, %v454
    %v456 = vld [vmem:[%s5] sm:$0x1]
    %v458 = vlaneseq
    %v459 = vshrl.u32 %v458, 7
    %v460 = vsub.s32 0, %v459
    %v461 = vrot.slane %v456, %v460
    %v463 = vadd.f32 %v437, %v461
    %v464 = vmul.f32 %v453, %v463
    %v465 = vadd.f32 %v195, %v464
    %v466 = vtanh.pop %v465
    %v467 = vsub.f32 %v76, %v466
    %v468 = vmul.f32 %v455, %v467
    %v469 = vadd.f32 %v466, %v468
    %470 = vst [vmem:[#allocation10] sm:$0xff] %v469
    // Predicated region
    $region42: #{tpu_custom_call.1} parent=1 // pred_check
      _
    $region43: #{tpu_custom_call.1} parent=1 // pred_check_branch
      %472 = sbr.rel (0) target = $region45
    $region44: #{tpu_custom_call.1} parent=1 // pred_region
      %s474 = ssub.s32 128, 128
      %475 = vsyncadd [#allocation4], %s474
      %s477 = sshll.u32 [#allocation10], 4
      %s478 = int_to_ptr.vmem [resolvable:$true] %s477
      %480 = dma.vmem_to_hbm [thread:$0]  %s478, 128, %s6, [#allocation4]
    $region45: #{tpu_custom_call.1} parent=1 // pred_fallthru
      _
    // Predicated region
    $region46: #{tpu_custom_call.1} parent=1 // pred_check
      _
    $region47: #{tpu_custom_call.1} parent=1 // pred_check_branch
      %482 = sbr.rel (0) target = $region49
    $region48: #{tpu_custom_call.1} parent=1 // pred_region
      %483 = dma.done [#allocation4], 128
    $region49: #{tpu_custom_call.1} parent=1 // pred_fallthru
      _
    %484 = vsyncpa [#allocation3], 1
    %485 = vsyncpa [#allocation6], 1
    %486 = vsyncpa [#allocation9], 1
    %487 = vsyncpa [#allocation4], 1

</llo_original>
